<compile_context>
chip_gen: v5e
topology: v5e:2x2
jax: 0.10.0
libtpu: 0.0.40
codegen_flags: <defaults>
</compile_context>

<pallas_src>
import functools

import jax
import jax.numpy as jnp
from jax.experimental import pallas as pl
from jax.experimental.pallas import tpu as pltpu


def _round_up(x, m):
    return ((x + m - 1) // m) * m


def _mixedop_kernel(x_ref, w_ref, b_ref, o_ref, *, n_ops, cout):
    # x_ref : VMEM (1, Cin, tile_m)        channels-first tile of pixels
    # w_ref : VMEM (n_ops*Cout, Cin)       alpha-scaled 1x1-conv weights (packed)
    # b_ref : VMEM (n_ops*Cout, 1)         alpha-scaled biases (f32)
    # o_ref : VMEM (1, Cout, tile_m)       lane-dense output tile
    x = x_ref[0]                                        # (Cin, tile_m)
    # One wide MXU matmul covering every candidate op; f32 accumulation.
    y = jnp.dot(w_ref[...], x, preferred_element_type=jnp.float32)
    y = jnp.maximum(y + b_ref[...], 0.0)                # bias + relu, f32 on VPU
    # Sum the per-op (Cout, tile_m) slabs (static, sublane-aligned slices).
    acc = y[0:cout, :]
    for i in range(1, n_ops):                           # n_ops tiny & static
        acc = acc + y[i * cout:(i + 1) * cout, :]
    o_ref[0] = acc


def mixed_op_forward(x_nchw, alphas, conv_w, conv_b, *,
                     tile_m_target=1024, compute_dtype=jnp.float32):
    """x_nchw: (N, Cin, H, W) f32; alphas: (n_ops,) mixing weights (>= 0, e.g.
    softmax); conv_w: (n_ops, Cin, Cout); conv_b: (n_ops, Cout).
    Returns (N, Cout, H, W) f32.

    compute_dtype=jnp.bfloat16 feeds bf16 operands to the MXU (recommended on
    v6e/v7x: halves HBM input traffic); accumulation stays f32."""
    n, cin, h, w = x_nchw.shape
    n_ops, cin_w, cout = conv_w.shape
    assert cin_w == cin

    # --- fold alpha into weights & bias --------------------------------------
    # Valid because relu is positively homogeneous and NAS mixing weights come
    # from a softmax (alpha_i >= 0). For arbitrary-sign weights, scale after
    # relu instead (per-op SMEM scalar).
    w_scaled = conv_w.astype(jnp.float32) * alphas[:, None, None]   # (n_ops,Cin,Cout)
    b_scaled = conv_b.astype(jnp.float32) * alphas[:, None]         # (n_ops,Cout)
    # Pack channels-first: (n_ops*Cout, Cin) so one matmul per tile serves all ops.
    w_cat = jnp.transpose(w_scaled, (0, 2, 1)).reshape(n_ops * cout, cin)
    w_cat = w_cat.astype(compute_dtype)
    b_cat = b_scaled.reshape(n_ops * cout, 1)                       # f32

    # --- channels-first flattening: NCHW -> (N, Cin, H*W) is a free reshape --
    hw = h * w
    x_flat = x_nchw.reshape(n, cin, hw).astype(compute_dtype)

    # --- tile selection -------------------------------------------------------
    # Big lane-dense tiles (mem-bound roofline), but keep the parallel grid
    # long enough to shard across TensorCores (v7x megacore).
    tile_m = max(128, min(_round_up(tile_m_target, 128), _round_up(hw, 128)))
    while tile_m >= 256 and tile_m % 256 == 0 and n * pl.cdiv(hw, tile_m) < 4:
        tile_m //= 2
    hw_pad = _round_up(hw, tile_m)
    if hw_pad != hw:
        x_flat = jnp.pad(x_flat, ((0, 0), (0, 0), (0, hw_pad - hw)))

    grid = (n, hw_pad // tile_m)

    # --- VMEM budget (double-buffered tiles + resident packed weights) -------
    itemsize = jnp.dtype(compute_dtype).itemsize
    vmem_needed = (2 * cin * tile_m * itemsize            # x tiles
                   + 2 * cout * tile_m * 4                # out tiles (f32)
                   + 2 * (n_ops * cout * cin * itemsize + n_ops * cout * 4))
    vmem_limit = int(min(max(4 * vmem_needed, 4 << 20), 32 << 20))

    kernel = functools.partial(_mixedop_kernel, n_ops=n_ops, cout=cout)

    out_flat = pl.pallas_call(
        kernel,
        out_shape=jax.ShapeDtypeStruct((n, cout, hw_pad), jnp.float32),
        grid_spec=pltpu.PrefetchScalarGridSpec(
            num_scalar_prefetch=0,
            grid=grid,
            in_specs=[
                # NOTE: add pipeline_mode=pl.Buffered(3) here only if profiling
                # shows exposed DMA after the layout/tile changes.
                pl.BlockSpec((1, cin, tile_m), lambda b, i: (b, 0, i)),   # x tile
                pl.BlockSpec((n_ops * cout, cin), lambda b, i: (0, 0)),   # packed W
                pl.BlockSpec((n_ops * cout, 1), lambda b, i: (0, 0)),     # packed b
            ],
            out_specs=pl.BlockSpec((1, cout, tile_m), lambda b, i: (b, 0, i)),
        ),
        compiler_params=pltpu.CompilerParams(
            dimension_semantics=("parallel", "parallel"),
            vmem_limit_bytes=vmem_limit),
    )(x_flat, w_cat, b_cat)

    if hw_pad != hw:
        out_flat = out_flat[:, :, :hw]
    # (N, Cout, H*W) -> (N, Cout, H, W) is a free reshape.
    return out_flat.reshape(n, cout, h, w)


def mixed_op_reference(x_nchw, alphas, conv_w, conv_b):
    """Pure-JAX reference mirroring the PyTorch loop."""
    n_ops = conv_w.shape[0]
    out = None
    for i in range(n_ops):
        # 1x1 conv == einsum over channels, NCHW preserved
        y = jnp.einsum("nchw,cd->ndhw", x_nchw, conv_w[i]) \
            + conv_b[i][None, :, None, None]
        term = alphas[i] * jax.nn.relu(y)
        out = term if out is None else out + term
    return out


if __name__ == "__main__":
    key = jax.random.PRNGKey(0)
    k_x, k_w, k_b, k_a = jax.random.split(key, 4)

    N, CIN, H, W = 2, 4, 16, 16
    COUT = 8
    N_OPS = 3  # len(PRIMITIVE): three candidate 1x1-conv ops

    x = jax.random.normal(k_x, (N, CIN, H, W), dtype=jnp.float32)
    conv_w = jax.random.normal(k_w, (N_OPS, CIN, COUT), dtype=jnp.float32) * 0.1
    conv_b = jax.random.normal(k_b, (N_OPS, COUT), dtype=jnp.float32) * 0.1
    alphas = jax.nn.softmax(jax.random.normal(k_a, (N_OPS,), dtype=jnp.float32))

    ref = mixed_op_reference(x, alphas, conv_w, conv_b)

    # f32 path (exact match with the reference).
    out = jax.block_until_ready(mixed_op_forward(x, alphas, conv_w, conv_b))
    assert out.shape == (N, COUT, H, W)
    assert jnp.allclose(out, ref, atol=1e-5, rtol=1e-5)

    # bf16-operand path (v6e/v7x bandwidth optimization); f32 accumulation, so
    # only operand rounding error remains.
    out_bf16 = jax.block_until_ready(
        mixed_op_forward(x, alphas, conv_w, conv_b, compute_dtype=jnp.bfloat16))
    assert jnp.allclose(out_bf16, ref, atol=5e-2, rtol=5e-2)

    print("KERNEL_OK")
</pallas_src>

<mosaic_0001>
module attributes {stable_mosaic.version = 11 : i64} {
  func.func @_mixedop_kernel(%arg0: i32, %arg1: i32, %arg2: memref<1x4x128xf32, #tpu.memory_space<vmem>>, %arg3: memref<24x4xf32, #tpu.memory_space<vmem>>, %arg4: memref<24x1xf32, #tpu.memory_space<vmem>>, %arg5: memref<1x8x128xf32, #tpu.memory_space<vmem>>) attributes {dimension_semantics = [#tpu.dimension_semantics<parallel>, #tpu.dimension_semantics<parallel>], iteration_bounds = array<i64: 2, 2>, scalar_prefetch = 0 : i64, scratch_operands = 0 : i64, tpu.core_type = #tpu.core_type<tc>, window_params = [{transform_indices = @transform_0, window_bounds = array<i64: 1, 4, 128>}, {pipeline_mode = #tpu.pipeline_mode<synchronous>, transform_indices = @transform_1, window_bounds = array<i64: 24, 4>}, {pipeline_mode = #tpu.pipeline_mode<synchronous>, transform_indices = @transform_2, window_bounds = array<i64: 24, 1>}, {transform_indices = @transform_3, window_bounds = array<i64: 1, 8, 128>}]} {
    %c0 = arith.constant 0 : index
    %c0_0 = arith.constant 0 : index
    %c0_1 = arith.constant 0 : index
    %0 = vector.load %arg2[%c0, %c0_0, %c0_1] : memref<1x4x128xf32, #tpu.memory_space<vmem>>, vector<1x4x128xf32>
    %1 = vector.shape_cast %0 : vector<1x4x128xf32> to vector<4x128xf32>
    %c0_2 = arith.constant 0 : index
    %c0_3 = arith.constant 0 : index
    %2 = vector.load %arg3[%c0_2, %c0_3] : memref<24x4xf32, #tpu.memory_space<vmem>>, vector<24x4xf32>
    %cst = arith.constant dense<0.000000e+00> : vector<24x128xf32>
    %3 = tpu.matmul %2, %1, %cst {dimension_numbers = #tpu.dot_dimension_numbers<[1], [0], [0], [1], [0, 0, 1, 1], [], []>} : vector<24x4xf32>, vector<4x128xf32>, vector<24x128xf32> -> vector<24x128xf32>
    %c0_4 = arith.constant 0 : index
    %c0_5 = arith.constant 0 : index
    %4 = vector.load %arg4[%c0_4, %c0_5] : memref<24x1xf32, #tpu.memory_space<vmem>>, vector<24x1xf32>
    %5 = vector.broadcast %4 : vector<24x1xf32> to vector<24x128xf32>
    %6 = arith.addf %3, %5 : vector<24x128xf32>
    %cst_6 = arith.constant 0.000000e+00 : f32
    %7 = vector.broadcast %cst_6 : f32 to vector<24x128xf32>
    %8 = arith.maximumf %6, %7 : vector<24x128xf32>
    %9 = vector.extract_strided_slice %8 {offsets = [0, 0], sizes = [8, 128], strides = [1, 1]} : vector<24x128xf32> to vector<8x128xf32>
    %10 = vector.extract_strided_slice %8 {offsets = [8, 0], sizes = [8, 128], strides = [1, 1]} : vector<24x128xf32> to vector<8x128xf32>
    %11 = arith.addf %9, %10 : vector<8x128xf32>
    %12 = vector.extract_strided_slice %8 {offsets = [16, 0], sizes = [8, 128], strides = [1, 1]} : vector<24x128xf32> to vector<8x128xf32>
    %13 = arith.addf %11, %12 : vector<8x128xf32>
    %c0_7 = arith.constant 0 : index
    %c0_8 = arith.constant 0 : index
    %c0_9 = arith.constant 0 : index
    %14 = vector.load %arg5[%c0_7, %c0_8, %c0_9] : memref<1x8x128xf32, #tpu.memory_space<vmem>>, vector<1x8x128xf32>
    %15 = vector.shape_cast %14 : vector<1x8x128xf32> to vector<8x128xf32>
    %16 = vector.shape_cast %13 : vector<8x128xf32> to vector<1x8x128xf32>
    tpu.vector_store %arg5[%c0_7, %c0_8, %c0_9], %16 {strides = array<i32>} : memref<1x8x128xf32, #tpu.memory_space<vmem>>, vector<1x8x128xf32>,
    return
  }
  func.func @transform_0(%arg0: i32, %arg1: i32) -> (i32, i32, i32) {
    %c0_i32 = arith.constant 0 : i32
    %c0_i32_0 = arith.constant 0 : i32
    return %arg0, %c0_i32, %arg1 : i32, i32, i32
  }
  func.func @transform_1(%arg0: i32, %arg1: i32) -> (i32, i32) {
    %c0_i32 = arith.constant 0 : i32
    %c0_i32_0 = arith.constant 0 : i32
    %c0_i32_1 = arith.constant 0 : i32
    return %c0_i32, %c0_i32_0 : i32, i32
  }
  func.func @transform_2(%arg0: i32, %arg1: i32) -> (i32, i32) {
    %c0_i32 = arith.constant 0 : i32
    %c0_i32_0 = arith.constant 0 : i32
    %c0_i32_1 = arith.constant 0 : i32
    return %c0_i32, %c0_i32_0 : i32, i32
  }
  func.func @transform_3(%arg0: i32, %arg1: i32) -> (i32, i32, i32) {
    %c0_i32 = arith.constant 0 : i32
    %c0_i32_0 = arith.constant 0 : i32
    return %arg0, %c0_i32, %arg1 : i32, i32, i32
  }
}

</mosaic_0001>

<llo_original>
// kernel: tpu_custom_call.1
$region0: #{tpu_custom_call.1}
  #allocation0 [shape = 'u32[]', space=smem, size = 0x4, offset = 0x4, fixed_abs, tag = 'smem constant byte address 0x4 - core index']
  #allocation1 [shape = 'u32[72,128]{1,0:T(1,128)}', space=vmem, size = 0x9000, scoped, tag = 'internal scratch']
  %s0 = inlined_call_operand.vmem [shape: f32[2,4,256], index: 0, kind: input, shape index: {}]
  %s1 = inlined_call_operand.vmem [shape: f32[24,4], index: 1, kind: input, shape index: {}]
  %s2 = inlined_call_operand.vmem [shape: f32[24,1], index: 2, kind: input, shape index: {}]
  %s3 = inlined_call_operand.hbm [shape: f32[2,8,256], index: 3, kind: output, shape index: {}]
  %s4 = sld [smem:[#allocation0]]
  $region45: #{tpu_custom_call.1} parent=0
    _
  %s6 = ssub.s32 1, %s4
  %s7 = scalar_select 0, %s6, %s4
  $region1: #{tpu_custom_call.1} parent=0
    #allocation2 [shape = 'u8[8192]{0}', space=vmem, size = 0x2000, scoped, tag = 'output window, operand 0']
    #allocation3 [shape = 's32[2]{0}', space=sflag, size = 0x8, scoped, tag = 'scoped memory for tpu_custom_call.1']
    %8 = vsyncpa [#allocation3], 0
    %s9 = scalar_lea.sflag [#allocation3], 1
    %10 = vsyncpa %s9, 0
    loop: start=0, step=1, limit=6
    $region2: #{tpu_custom_call.1} parent=1 // loop_pre_header
      _
    $region3: #{tpu_custom_call.1} parent=1 // loop_header
      %s12 = sphi 0, %s16
      %p13 = scmp.ge.s32.totalorder %s12, 6
      %s19 = sphi 0, %s31
      %s20 = sphi 0, %s27
      %s21 = sphi 0, %s19
      %s22 = sphi 0, %s20
      %s23 = sphi 0, %s21
      %s24 = sphi 0, %s22
      %s36 = sphi 0, %s38
      %s39 = sphi 0, %s36
      %s40 = sphi 0, %s39
      %s56 = sphi 0, %s40
      %s60 = sphi 0, %s60
      %s62 = sphi 0, %s60
      %s63 = sphi 0, %s62
      %s77 = sphi 0, %s63
      %s81 = sphi 0, %s81
      %s83 = sphi 0, %s81
      %s84 = sphi 0, %s83
      %s98 = sphi 0, %s84
      %s106 = sphi 0, %s108
      %s109 = sphi 0, %s106
      %s110 = sphi 0, %s109
      %s126 = sphi 0, %s110
    $region4: #{tpu_custom_call.1} parent=1 // loop_header_branch
      %15 = sbr.rel (%p13) target = $region8
    $region5: #{tpu_custom_call.1} parent=1 // loop_body
      %s17 = ssub.s32 %s12, 1
      %s18 = ssub.s32 %s12, 2
      %s25 = sadd.s32 1, %s20
      %p26 = scmp.ge.s32.totalorder %s25, 2
      %s27 = scalar_select %p26, 0, %s25
      %s28 = sadd.s32 1, %s19
      %s29 = scalar_select %p26, %s28, %s19
      %p30 = scmp.ge.s32.totalorder %s29, 2
      %s31 = scalar_select %p30, 0, %s29
      %s32 = ssub.s32 %s19, %s31
      %s33 = ssub.s32 %s20, %s27
      %s34 = sor.u32 %s32, %s33
      %p35 = scmp.eq.s32.totalorder %s34, 0
      %s37 = sadd.s32 %s36, 1
      %s38 = scalar_select %p35, %s36, %s37
      %p41 = pneg %p35
      %p42 = scmp.eq.s32.totalorder %s12, 3
      %p43 = por %p41, %p42
      %p44 = scmp.ne.s32.totalorder %s36, %s39
      %p45 = scmp.eq.s32.totalorder %s12, 0
      %p46 = por %p44, %p45
      %p47 = scmp.ne.s32.totalorder %s36, %s39
      %p48 = scmp.eq.s32.totalorder %s17, 3
      %p49 = por %p47, %p48
      %p50 = scmp.ne.s32.totalorder %s39, %s40
      %p51 = scmp.eq.s32.totalorder %s17, 0
      %p52 = por %p50, %p51
      %p53 = scmp.ne.s32.totalorder %s39, %s40
      %p54 = scmp.eq.s32.totalorder %s18, 3
      %p55 = por %p53, %p54
      %p57 = scmp.ne.s32.totalorder %s40, %s56
      %p58 = scmp.eq.s32.totalorder %s18, 0
      %p59 = por %p57, %p58
      %s61 = sadd.s32 %s60, 1
      %p64 = scmp.eq.s32.totalorder %s12, 3
      %p65 = scmp.ne.s32.totalorder %s60, %s62
      %p66 = scmp.eq.s32.totalorder %s12, 0
      %p67 = por %p65, %p66
      %p68 = scmp.ne.s32.totalorder %s60, %s62
      %p69 = scmp.eq.s32.totalorder %s17, 3
      %p70 = por %p68, %p69
      %p71 = scmp.ne.s32.totalorder %s62, %s63
      %p72 = scmp.eq.s32.totalorder %s17, 0
      %p73 = por %p71, %p72
      %p74 = scmp.ne.s32.totalorder %s62, %s63
      %p75 = scmp.eq.s32.totalorder %s18, 3
      %p76 = por %p74, %p75
      %p78 = scmp.ne.s32.totalorder %s63, %s77
      %p79 = scmp.eq.s32.totalorder %s18, 0
      %p80 = por %p78, %p79
      %s82 = sadd.s32 %s81, 1
      %p85 = scmp.eq.s32.totalorder %s12, 3
      %p86 = scmp.ne.s32.totalorder %s81, %s83
      %p87 = scmp.eq.s32.totalorder %s12, 0
      %p88 = por %p86, %p87
      %p89 = scmp.ne.s32.totalorder %s81, %s83
      %p90 = scmp.eq.s32.totalorder %s17, 3
      %p91 = por %p89, %p90
      %p92 = scmp.ne.s32.totalorder %s83, %s84
      %p93 = scmp.eq.s32.totalorder %s17, 0
      %p94 = por %p92, %p93
      %p95 = scmp.ne.s32.totalorder %s83, %s84
      %p96 = scmp.eq.s32.totalorder %s18, 3
      %p97 = por %p95, %p96
      %p99 = scmp.ne.s32.totalorder %s84, %s98
      %p100 = scmp.eq.s32.totalorder %s18, 0
      %p101 = por %p99, %p100
      %s102 = ssub.s32 %s19, %s31
      %s103 = ssub.s32 %s20, %s27
      %s104 = sor.u32 %s102, %s103
      %p105 = scmp.eq.s32.totalorder %s104, 0
      %s107 = sadd.s32 %s106, 1
      %s108 = scalar_select %p105, %s106, %s107
      %p111 = pneg %p105
      %p112 = scmp.eq.s32.totalorder %s12, 3
      %p113 = por %p111, %p112
      %p114 = scmp.ne.s32.totalorder %s106, %s109
      %p115 = scmp.eq.s32.totalorder %s12, 0
      %p116 = por %p114, %p115
      %p117 = scmp.ne.s32.totalorder %s106, %s109
      %p118 = scmp.eq.s32.totalorder %s17, 3
      %p119 = por %p117, %p118
      %p120 = scmp.ne.s32.totalorder %s109, %s110
      %p121 = scmp.eq.s32.totalorder %s17, 0
      %p122 = por %p120, %p121
      %p123 = scmp.ne.s32.totalorder %s109, %s110
      %p124 = scmp.eq.s32.totalorder %s18, 3
      %p125 = por %p123, %p124
      %p127 = scmp.ne.s32.totalorder %s110, %s126
      %p128 = scmp.eq.s32.totalorder %s18, 0
      %p129 = por %p127, %p128
      %p130 = scmp.le.s32.totalorder 1, %s12
      %p131 = scmp.lt.s32.totalorder %s12, 5
      %p132 = pnand %p130, %p131
      %p133 = pneg %p132
      // Predicated region
      $region9: #{tpu_custom_call.1} parent=5 // pred_check
        _
      $region10: #{tpu_custom_call.1} parent=5 // pred_check_branch
        %135 = sbr.rel (%p132) target = $region12
      $region11: #{tpu_custom_call.1} parent=5 // pred_region
        %s136 = ssub.s32 %s12, 1
        // Predicated region
        $region13: #{tpu_custom_call.1} parent=11 // pred_check
          %p137 = pneg %p73
        $region14: #{tpu_custom_call.1} parent=11 // pred_check_branch
          %139 = sbr.rel (%p137) target = $region16
        $region15: #{tpu_custom_call.1} parent=11 // pred_region
          _
        $region16: #{tpu_custom_call.1} parent=11 // pred_fallthru
          _
        // Predicated region
        $region17: #{tpu_custom_call.1} parent=11 // pred_check
          %p140 = pneg %p94
        $region18: #{tpu_custom_call.1} parent=11 // pred_check_branch
          %142 = sbr.rel (%p140) target = $region20
        $region19: #{tpu_custom_call.1} parent=11 // pred_region
          _
        $region20: #{tpu_custom_call.1} parent=11 // pred_fallthru
          _
      $region12: #{tpu_custom_call.1} parent=5 // pred_fallthru
        _
      %p143 = scmp.lt.s32.totalorder %s12, 4
      // Predicated region
      $region21: #{tpu_custom_call.1} parent=5 // pred_check
        %p144 = pneg %p143
      $region22: #{tpu_custom_call.1} parent=5 // pred_check_branch
        %146 = sbr.rel (%p144) target = $region24
      $region23: #{tpu_custom_call.1} parent=5 // pred_region
        // Predicated region
        $region25: #{tpu_custom_call.1} parent=23 // pred_check
          %p147 = pneg %p46
        $region26: #{tpu_custom_call.1} parent=23 // pred_check_branch
          %149 = sbr.rel (%p147) target = $region28
        $region27: #{tpu_custom_call.1} parent=23 // pred_region
          %p150 = scmp.lt.s32.totalorder %s19, 1
          %s151 = scalar_select %p150, %s19, 1
          %p152 = scmp.lt.s32.totalorder %s20, 1
          %s153 = scalar_select %p152, %s20, 1
          %s154 = smul.addr %s151, 2
          %s155 = sadd.s32 %s153, %s154
          %s156 = smul.addr %s155, 4
          %s157 = scalar_lea.vmem %s0, %s156
        $region28: #{tpu_custom_call.1} parent=23 // pred_fallthru
          _
      $region24: #{tpu_custom_call.1} parent=5 // pred_fallthru
        _
      %p158 = scmp.le.s32.totalorder 1, %s12
      %p159 = scmp.lt.s32.totalorder %s12, 5
      %p160 = pnand %p158, %p159
      %p161 = pneg %p160
      // Predicated region
      $region29: #{tpu_custom_call.1} parent=5 // pred_check
        _
      $region30: #{tpu_custom_call.1} parent=5 // pred_check_branch
        %163 = sbr.rel (%p160) target = $region32
      $region31: #{tpu_custom_call.1} parent=5 // pred_region
        %s164 = ssub.s32 %s12, 1
        %p165 = scmp.lt.s32.totalorder %s21, 1
        %s166 = scalar_select %p165, %s21, 1
        %p167 = scmp.lt.s32.totalorder %s22, 1
        %s168 = scalar_select %p167, %s22, 1
        %s169 = smul.addr %s166, 2
        %s170 = sadd.s32 %s168, %s169
        %s171 = smul.addr %s170, 4
        %s172 = scalar_lea.vmem %s0, %s171
        %p173 = pneg %p52
        %p174 = pneg %p49
        %p175 = pneg %p73
        %p176 = pneg %p70
        %p177 = pneg %p94
        %p178 = pneg %p91
        %p179 = pneg %p122
        %p180 = pneg %p119
        %s181 = sand.u32 %s109, 1
        %s182 = scalar_lea.sflag [#allocation3], %s181
        %s183 = sand.u32 %s109, 1
        %s184 = smul.addr %s183, 8
        %s185 = scalar_lea.vmem [#allocation2], %s184
        %p186 = scmp.lt.s32.totalorder %s21, 1
        %s187 = scalar_select %p186, %s21, 1
        %p188 = scmp.lt.s32.totalorder %s22, 1
        %s189 = scalar_select %p188, %s22, 1
        %s190 = smul.addr %s187, 2
        %s191 = sadd.s32 %s189, %s190
        %s192 = smul.addr %s191, 4
        %s193 = scalar_lea.vmem %s0, %s192
        %v194 = vld [vmem:[%s193] sm:$0xf]
        %v195 = vld [vmem:[%s1] sm:$0xff]
        %v196 = vld [vmem:[%s1 + $0x8] sm:$0xff]
        %v197 = vld [vmem:[%s1 + $0x10] sm:$0xff]
        %v198 = vld [vmem:[%s2] sm:$0xff]
        %v199 = vld [vmem:[%s2 + $0x8] sm:$0xff]
        %v200 = vld [vmem:[%s2 + $0x10] sm:$0xff]
        %202 = vset.pattern.permute.xlu0 0
        %203 = vperm.xlu0 %202, %v198
        %v204 = vpop.permute.xlu0 %203
        %207 = vset.pattern.permute.xlu0 0
        %208 = vperm.xlu0 %207, %v199
        %v209 = vpop.permute.xlu0 %208
        %212 = vset.pattern.permute.xlu0 0
        %213 = vperm.xlu0 %212, %v200
        %v214 = vpop.permute.xlu0 %213
        %vm216 = vcmask 31744
        %v218 = vsel %vm216, %v195, 0
        %v221 = vsel %vm216, %v196, 0
        %v224 = vsel %vm216, %v197, 0
        %vm226 = vcmask 1043456
        %v228 = vsel %vm226, %v194, 0
        %230 = vmatpush.msra.mxu0 0.0
        %231 = vmatpush.msra.mxu0 0.0
        %232 = vmatpush.msra.mxu0 0.0
        %233 = vmatpush.msra.mxu0 0.0
        %234 = vmatpush.msra.mxu0 0.0
        %235 = vmatpush.msra.mxu0 0.0
        %236 = vmatpush.msra.mxu0 0.0
        %237 = vmatpush.msra.mxu0 0.0
        %238 = vmatpush.msra.mxu0 0.0
        %239 = vmatpush.msra.mxu0 0.0
        %240 = vmatpush.msra.mxu0 0.0
        %241 = vmatpush.msra.mxu0 0.0
        %242 = vmatpush.msra.mxu0 0.0
        %243 = vmatpush.msra.mxu0 0.0
        %244 = vmatpush.msra.mxu0 0.0
        %245 = vmatpush.msra.mxu0 %v228
        %246 = vmatmul.f32.gmra.mxu0 %v218
        %v247 = vpop.f32.mrf.mxu0
        %v248 = vadd.f32 %v204, %v247
        %249 = vmatmul.f32.gmra.mxu0 %v221
        %v250 = vpop.f32.mrf.mxu0
        %v251 = vadd.f32 %v209, %v250
        %252 = vmatmul.f32.gmra.mxu0 %v224
        %v253 = vpop.f32.mrf.mxu0
        %v254 = vadd.f32 %v214, %v253
        %255 = vdwg.mxu0
        %v256 = vmax.f32 %v248, 0.0
        %v257 = vmax.f32 %v251, 0.0
        %v258 = vmax.f32 %v254, 0.0
        %v259 = vadd.f32 %v256, %v257
        %v260 = vadd.f32 %v259, %v258
        %261 = vst [vmem:[%s185] sm:$0xff] %v260
        %s262 = sand.u32 %s109, 1
        %s263 = scalar_lea.sflag [#allocation3], %s262
        %s264 = sand.u32 %s109, 1
        %s265 = smul.addr %s264, 8
        %s266 = scalar_lea.vmem [#allocation2], %s265
        // Predicated region
        $region33: #{tpu_custom_call.1} parent=31 // pred_check
          %p267 = pneg %p119
        $region34: #{tpu_custom_call.1} parent=31 // pred_check_branch
          %269 = sbr.rel (%p267) target = $region36
        $region35: #{tpu_custom_call.1} parent=31 // pred_region
          %271 = vsyncadd %s263, 0
          %s272 = smul.addr %s21, 2
          %s273 = sadd.s32 %s22, %s272
          %s274 = smul.addr %s273, 8
          %s275 = scalar_lea.hbm %s3, %s274
          %s277 = sshll.u32 %s266, 4
          %s278 = int_to_ptr.vmem [resolvable:$true] %s277
          %s279 = sshll.u32 %s275, 4
          %s280 = int_to_ptr.hbm [resolvable:$true] %s279
          %282 = dma.vmem_to_hbm [thread:$0]  %s278, 128, %s280, %s263
        $region36: #{tpu_custom_call.1} parent=31 // pred_fallthru
          _
      $region32: #{tpu_custom_call.1} parent=5 // pred_fallthru
        _
      %p283 = scmp.le.s32.totalorder 2, %s12
      // Predicated region
      $region37: #{tpu_custom_call.1} parent=5 // pred_check
        %p284 = pneg %p283
      $region38: #{tpu_custom_call.1} parent=5 // pred_check_branch
        %286 = sbr.rel (%p284) target = $region40
      $region39: #{tpu_custom_call.1} parent=5 // pred_region
        %s287 = ssub.s32 %s12, 2
        // Predicated region
        $region41: #{tpu_custom_call.1} parent=39 // pred_check
          %p288 = pneg %p125
        $region42: #{tpu_custom_call.1} parent=39 // pred_check_branch
          %290 = sbr.rel (%p288) target = $region44
        $region43: #{tpu_custom_call.1} parent=39 // pred_region
          %s291 = sand.u32 %s110, 1
          %s292 = scalar_lea.sflag [#allocation3], %s291
          %s293 = sand.u32 %s110, 1
          %s294 = smul.addr %s293, 8
          %s295 = scalar_lea.vmem [#allocation2], %s294
          %297 = dma.done %s292, 128
        $region44: #{tpu_custom_call.1} parent=39 // pred_fallthru
          _
      $region40: #{tpu_custom_call.1} parent=5 // pred_fallthru
        _
    $region6: #{tpu_custom_call.1} parent=1 // loop_footer
      %s16 = sadd.s32 1, %s12
    $region7: #{tpu_custom_call.1} parent=1 // loop_footer_branch
      %11 = sbr.rel target = $region3
    $region8: #{tpu_custom_call.1} parent=1 // loop_exit
      _
    %298 = vsyncpa [#allocation3], 1
    %s299 = scalar_lea.sflag [#allocation3], 1
    %300 = vsyncpa %s299, 1

</llo_original>
